<compile_context>
chip_gen: v7x
topology: tpu7x:2x2x1
jax: 0.10.0
libtpu: 0.0.40
codegen_flags: <defaults>
</compile_context>

<pallas_src>
import jax
import jax.numpy as jnp
from jax.experimental import pallas as pl
from jax.experimental.pallas import tpu as pltpu


# ---------------------------------------------------------------------------
# Kernels
# ---------------------------------------------------------------------------
def _linear_kernel(x_ref, w_ref, b_ref, h_ref):
    """H row-tile = X row-tile @ W + b.  W and b are VMEM-resident."""
    h = jnp.dot(x_ref[...], w_ref[...], preferred_element_type=jnp.float32)
    h_ref[...] = (h + b_ref[...]).astype(h_ref.dtype)


def _aggr_kernel(a_ref, h_ref, o_ref):
    """OUT row-tile = A_hat row-panel @ H.  H is VMEM-resident."""
    o_ref[...] = jnp.dot(a_ref[...], h_ref[...],
                         preferred_element_type=jnp.float32).astype(o_ref.dtype)


# ---------------------------------------------------------------------------
# Helpers
# ---------------------------------------------------------------------------
def _round_up(x, m):
    return ((x + m - 1) // m) * m


def _pick_tile(dim, cap):
    """Largest multiple of 128 <= cap that divides dim (dim is a mult of 128)."""
    t = min(cap, dim)
    while dim % t:
        t -= 128
    return t


# ---------------------------------------------------------------------------
# Graph preprocessing (cacheable per graph — hoisted out of the hot path)
# ---------------------------------------------------------------------------
def build_normalized_adjacency(edge_index, num_nodes, *, n_pad=None,
                               dtype=jnp.float32):
    """Dense normalized adjacency A_hat[v,u] = sum_{(row=v,col=u)} norm_e,
    padded to [n_pad, n_pad] and built directly at `dtype`.

    Mirrors addSelfConnect + calDegree + deg^-0.5 norm + scatter-add of the
    PyTorch module.  Static per graph: build once, reuse across layers/steps.
    """
    n = int(num_nodes)
    if n_pad is None:
        n_pad = _round_up(max(n, 8), 128)

    # addSelfConnect: append (v, v) for every node.
    self_loops = jnp.stack([jnp.arange(n, dtype=jnp.int32)] * 2, axis=0)
    ei = jnp.concatenate([edge_index.astype(jnp.int32), self_loops], axis=1)
    row, col = ei[0], ei[1]

    # calDegree(row): occurrence count per node (self loops guarantee deg>=1).
    deg = jnp.zeros((n,), jnp.float32).at[row].add(1.0)
    deg_isqrt = deg ** -0.5
    norm = deg_isqrt[row] * deg_isqrt[col]

    # Duplicate edges sum, exactly matching index_select + scale + scatter-add.
    # TODO(synk): dense A_hat is O(N^2) HBM — fine for Cora, replace with a
    # scalar-prefetched sparse aggregation for much larger graphs.
    a_hat = jnp.zeros((n_pad, n_pad), dtype).at[row, col].add(norm.astype(dtype))
    return a_hat


# ---------------------------------------------------------------------------
# Hot path: two lane-dense MXU kernels
# ---------------------------------------------------------------------------
def gcn_conv_apply(x, a_hat_pad, weight, bias, *, compute_dtype=jnp.float32):
    """GCNConv forward given a precomputed padded A_hat.

    x: [N, Cin] f32, a_hat_pad: [n_pad, n_pad] (any float dtype),
    weight: [Cout, Cin], bias: [Cout].  Returns [N, Cout] f32.
    """
    n, cin = x.shape
    cout = weight.shape[0]
    n_pad = a_hat_pad.shape[0]

    cin_pad = _round_up(max(cin, 8), 128)
    cout_pad = _round_up(max(cout, 8), 128)
    itemsize = jnp.dtype(compute_dtype).itemsize

    # ---- padded, lane-dense operands --------------------------------------
    x_p = jnp.zeros((n_pad, cin_pad), compute_dtype)
    x_p = x_p.at[:n, :cin].set(x.astype(compute_dtype))
    w_p = jnp.zeros((cin_pad, cout_pad), compute_dtype)
    w_p = w_p.at[:cin, :cout].set(weight.T.astype(compute_dtype))
    b_p = jnp.zeros((1, cout_pad), jnp.float32)
    b_p = b_p.at[0, :cout].set(bias.astype(jnp.float32))
    a_p = a_hat_pad.astype(compute_dtype)   # no-op if built at compute_dtype

    # ---- tile sizes (largest divisor <= 512; bandwidth-bound A_hat stream) -
    tile_mx = _pick_tile(n_pad, 512)   # X row tile (linear kernel)
    tile_ma = _pick_tile(n_pad, 512)   # A_hat row tile (aggregation kernel)
    # NOTE(v7x): if n_pad // tile_ma is odd the 2-TC split leaves one core
    # idle on the last tile (<= ~9%); pad N upstream for an even count if
    # that matters — we do not shrink tiles to force it.

    cparams = pltpu.CompilerParams(
        dimension_semantics=("parallel",),
        vmem_limit_bytes=48 * 1024 * 1024,   # sized against v7x's 64 MiB VMEM
    )

    # ---- kernel 1: H = X @ W^T + b  (W, b resident; no reduction axis) -----
    h = pl.pallas_call(
        _linear_kernel,
        out_shape=jax.ShapeDtypeStruct((n_pad, cout_pad), compute_dtype),
        grid_spec=pltpu.PrefetchScalarGridSpec(
            num_scalar_prefetch=0,
            grid=(n_pad // tile_mx,),
            in_specs=[
                pl.BlockSpec((tile_mx, cin_pad), lambda i: (i, 0)),
                pl.BlockSpec((cin_pad, cout_pad), lambda i: (0, 0)),
                pl.BlockSpec((1, cout_pad), lambda i: (0, 0)),
            ],
            out_specs=pl.BlockSpec((tile_mx, cout_pad), lambda i: (i, 0)),
        ),
        compiler_params=cparams,
        cost_estimate=pl.CostEstimate(
            flops=2 * n_pad * cin_pad * cout_pad,
            transcendentals=0,
            bytes_accessed=itemsize * (n_pad * cin_pad + cin_pad * cout_pad
                                       + n_pad * cout_pad) + 4 * cout_pad,
        ),
    )(x_p, w_p, b_p)

    # ---- kernel 2: OUT = A_hat @ H  (H resident; A_hat streamed full-K) ----
    out_pad = pl.pallas_call(
        _aggr_kernel,
        out_shape=jax.ShapeDtypeStruct((n_pad, cout_pad), jnp.float32),
        grid_spec=pltpu.PrefetchScalarGridSpec(
            num_scalar_prefetch=0,
            grid=(n_pad // tile_ma,),
            in_specs=[
                pl.BlockSpec((tile_ma, n_pad), lambda i: (i, 0)),
                pl.BlockSpec((n_pad, cout_pad), lambda i: (0, 0)),
            ],
            out_specs=pl.BlockSpec((tile_ma, cout_pad), lambda i: (i, 0)),
        ),
        compiler_params=cparams,
        cost_estimate=pl.CostEstimate(
            flops=2 * n_pad * n_pad * cout_pad,
            transcendentals=0,
            bytes_accessed=itemsize * (n_pad * n_pad + n_pad * cout_pad)
            + 4 * n_pad * cout_pad,
        ),
    )(a_p, h)

    return out_pad[:n, :cout]


def gcn_conv(x, edge_index, weight, bias, *, compute_dtype=jnp.float32):
    """Convenience one-shot GCNConv forward (builds A_hat then applies).

    For repeated calls on the same graph, build A_hat once with
    `build_normalized_adjacency` and call `gcn_conv_apply` directly.
    """
    a_hat = build_normalized_adjacency(edge_index, x.shape[0],
                                       dtype=compute_dtype)
    return gcn_conv_apply(x, a_hat, weight, bias, compute_dtype=compute_dtype)


# ---------------------------------------------------------------------------
# Pure-JAX reference matching the PyTorch forward exactly.
# ---------------------------------------------------------------------------
def gcn_conv_ref(x, edge_index, weight, bias):
    n = x.shape[0]
    self_loops = jnp.stack([jnp.arange(n, dtype=jnp.int32)] * 2, axis=0)
    ei = jnp.concatenate([edge_index.astype(jnp.int32), self_loops], axis=1)
    row, col = ei[0], ei[1]
    h = x @ weight.T + bias
    deg = jnp.zeros((n,), jnp.float32).at[row].add(1.0)
    dis = deg ** -0.5
    norm = dis[row] * dis[col]
    tar = norm[:, None] * h[col]
    out = jnp.zeros((n, h.shape[1]), jnp.float32).at[row].add(tar)
    return out


if __name__ == "__main__":
    key = jax.random.PRNGKey(0)

    def make_case(key, n_nodes, cin, cout, n_edges):
        k_x, k_w, k_b, k_src, k_dst = jax.random.split(key, 5)
        x = jax.random.normal(k_x, (n_nodes, cin), dtype=jnp.float32)
        src = jax.random.randint(k_src, (n_edges,), 0, n_nodes, dtype=jnp.int32)
        dst = jax.random.randint(k_dst, (n_edges,), 0, n_nodes, dtype=jnp.int32)
        edge_index = jnp.stack([src, dst], axis=0)
        bound = 1.0 / (cin ** 0.5)
        weight = jax.random.uniform(k_w, (cout, cin), minval=-bound,
                                    maxval=bound, dtype=jnp.float32)
        bias = jax.random.uniform(k_b, (cout,), minval=-bound, maxval=bound,
                                  dtype=jnp.float32)
        return x, edge_index, weight, bias

    # Case 1: small shapes consistent with the module (node_num=32, 16->8).
    k1, k2 = jax.random.split(key)
    x, ei, w, b = make_case(k1, 32, 16, 8, 64)
    out = jax.block_until_ready(gcn_conv(x, ei, w, b))
    ref = jax.block_until_ready(gcn_conv_ref(x, ei, w, b))
    assert out.shape == (32, 8)
    assert jnp.allclose(out, ref, atol=1e-4, rtol=1e-4), "f32 mismatch (small)"

    # Cached-adjacency hot path (A_hat built once, reused).
    a_hat = build_normalized_adjacency(ei, 32, dtype=jnp.float32)
    out_cached = jax.block_until_ready(gcn_conv_apply(x, a_hat, w, b))
    assert jnp.allclose(out_cached, ref, atol=1e-4, rtol=1e-4), "cached mismatch"

    # bf16 operand path (f32 accumulation) — loose tolerance by design.
    out_bf16 = jax.block_until_ready(
        gcn_conv(x, ei, w, b, compute_dtype=jnp.bfloat16))
    assert jnp.allclose(out_bf16, ref, atol=5e-2, rtol=5e-2), "bf16 mismatch"

    # Case 2: multi-tile grid (N=640 -> 5 row tiles; exercises resident H/W).
    x2, ei2, w2, b2 = make_case(k2, 640, 200, 16, 2000)
    out2 = jax.block_until_ready(gcn_conv(x2, ei2, w2, b2))
    ref2 = jax.block_until_ready(gcn_conv_ref(x2, ei2, w2, b2))
    assert out2.shape == (640, 16)
    assert jnp.allclose(out2, ref2, atol=1e-4, rtol=1e-4), "f32 mismatch (tiled)"

    print("KERNEL_OK")
</pallas_src>

<mosaic_0001>
module attributes {stable_mosaic.version = 11 : i64} {
  func.func @_linear_kernel(%arg0: i32, %arg1: memref<128x128xf32, #tpu.memory_space<vmem>>, %arg2: memref<128x128xf32, #tpu.memory_space<vmem>>, %arg3: memref<1x128xf32, #tpu.memory_space<vmem>>, %arg4: memref<128x128xf32, #tpu.memory_space<vmem>>) attributes {dimension_semantics = [#tpu.dimension_semantics<parallel>], iteration_bounds = array<i64: 1>, scalar_prefetch = 0 : i64, scratch_operands = 0 : i64, tpu.core_type = #tpu.core_type<tc>, window_params = [{transform_indices = @transform_0, window_bounds = array<i64: 128, 128>}, {pipeline_mode = #tpu.pipeline_mode<synchronous>, transform_indices = @transform_1, window_bounds = array<i64: 128, 128>}, {pipeline_mode = #tpu.pipeline_mode<synchronous>, transform_indices = @transform_2, window_bounds = array<i64: 1, 128>}, {transform_indices = @transform_3, window_bounds = array<i64: 128, 128>}]} {
    %c0 = arith.constant 0 : index
    %c0_0 = arith.constant 0 : index
    %0 = vector.load %arg1[%c0, %c0_0] : memref<128x128xf32, #tpu.memory_space<vmem>>, vector<128x128xf32>
    %c0_1 = arith.constant 0 : index
    %c0_2 = arith.constant 0 : index
    %1 = vector.load %arg2[%c0_1, %c0_2] : memref<128x128xf32, #tpu.memory_space<vmem>>, vector<128x128xf32>
    %cst = arith.constant dense<0.000000e+00> : vector<128x128xf32>
    %2 = tpu.matmul %0, %1, %cst {dimension_numbers = #tpu.dot_dimension_numbers<[1], [0], [0], [1], [0, 0, 1, 1], [], []>} : vector<128x128xf32>, vector<128x128xf32>, vector<128x128xf32> -> vector<128x128xf32>
    %c0_3 = arith.constant 0 : index
    %c0_4 = arith.constant 0 : index
    %3 = vector.load %arg3[%c0_3, %c0_4] : memref<1x128xf32, #tpu.memory_space<vmem>>, vector<1x128xf32>
    %4 = vector.broadcast %3 : vector<1x128xf32> to vector<128x128xf32>
    %5 = arith.addf %2, %4 : vector<128x128xf32>
    %c0_5 = arith.constant 0 : index
    %c0_6 = arith.constant 0 : index
    %6 = vector.load %arg4[%c0_5, %c0_6] : memref<128x128xf32, #tpu.memory_space<vmem>>, vector<128x128xf32>
    tpu.vector_store %arg4[%c0_5, %c0_6], %5 {strides = array<i32>} : memref<128x128xf32, #tpu.memory_space<vmem>>, vector<128x128xf32>,
    return
  }
  func.func @transform_0(%arg0: i32) -> (i32, i32) {
    %c0_i32 = arith.constant 0 : i32
    %c0_i32_0 = arith.constant 0 : i32
    return %arg0, %c0_i32 : i32, i32
  }
  func.func @transform_1(%arg0: i32) -> (i32, i32) {
    %c0_i32 = arith.constant 0 : i32
    %c0_i32_0 = arith.constant 0 : i32
    %c0_i32_1 = arith.constant 0 : i32
    return %c0_i32, %c0_i32_0 : i32, i32
  }
  func.func @transform_2(%arg0: i32) -> (i32, i32) {
    %c0_i32 = arith.constant 0 : i32
    %c0_i32_0 = arith.constant 0 : i32
    %c0_i32_1 = arith.constant 0 : i32
    return %c0_i32, %c0_i32_0 : i32, i32
  }
  func.func @transform_3(%arg0: i32) -> (i32, i32) {
    %c0_i32 = arith.constant 0 : i32
    %c0_i32_0 = arith.constant 0 : i32
    return %arg0, %c0_i32 : i32, i32
  }
}

</mosaic_0001>

<llo_original>
// kernel: tpu_custom_call.1
$region0: #{tpu_custom_call.1}
  #allocation0 [shape = 'u32[]', space=smem, size = 0x4, offset = 0x4, fixed_abs, tag = 'smem constant byte address 0x4 - core index']
  #allocation1 [shape = 'u32[144,128]{1,0:T(1,128)}', space=vmem, size = 0x12000, scoped, tag = 'internal scratch']
  %s0 = inlined_call_operand.hbm [shape: f32[128,128], index: 0, kind: input, shape index: {}]
  %s1 = inlined_call_operand.hbm [shape: f32[128,128], index: 1, kind: input, shape index: {}]
  %s2 = inlined_call_operand.vmem [shape: f32[1,128], index: 2, kind: input, shape index: {}]
  %s3 = inlined_call_operand.hbm [shape: f32[128,128], index: 3, kind: output, shape index: {}]
  %s4 = sld [smem:[#allocation0]]
  $region30: #{tpu_custom_call.1} parent=0
    _
  %s6 = ssub.s32 1, %s4
  %s7 = scalar_select 0, %s6, %s4
  $region1: #{tpu_custom_call.1} parent=0
    #allocation2 [shape = 'u8[65536]{0}', space=vmem, size = 0x10000, scoped, tag = 'input window, operand 0, single buffered']
    #allocation3 [shape = 's32[1]{0}', space=sflag, size = 0x4, scoped, tag = 'scoped memory for tpu_custom_call.1']
    #allocation4 [shape = 's32[1]{0}', space=sflag, size = 0x4, scoped, tag = 'scoped memory for tpu_custom_call.1']
    #allocation5 [shape = 'u8[65536]{0}', space=vmem, size = 0x10000, scoped, tag = 'input window, operand 1, single buffered']
    #allocation6 [shape = 's32[1]{0}', space=sflag, size = 0x4, scoped, tag = 'scoped memory for tpu_custom_call.1']
    #allocation7 [shape = 'u8[65536]{0}', space=vmem, size = 0x10000, scoped, tag = 'output window, operand 0, single buffered']
    %8 = vsyncpa [#allocation3], 0
    %9 = vsyncpa [#allocation6], 0
    %10 = vsyncpa [#allocation4], 0
    // Predicated region
    $region2: #{tpu_custom_call.1} parent=1 // pred_check
      _
    $region3: #{tpu_custom_call.1} parent=1 // pred_check_branch
      %12 = sbr.rel (0) target = $region5
    $region4: #{tpu_custom_call.1} parent=1 // pred_region
      %s14 = ssub.s32 2048, 2048
      %15 = vsyncadd [#allocation3], %s14
      %s16 = sshll.u32 [#allocation2], 4
      %s17 = int_to_ptr.vmem [resolvable:$true] %s16
      %22 = dma.hbm_to_vmem [thread:$0]  %s0, 2048, %s17, [#allocation3], 128, 128, 8
    $region5: #{tpu_custom_call.1} parent=1 // pred_fallthru
      _
    // Predicated region
    $region6: #{tpu_custom_call.1} parent=1 // pred_check
      _
    $region7: #{tpu_custom_call.1} parent=1 // pred_check_branch
      %24 = sbr.rel (0) target = $region9
    $region8: #{tpu_custom_call.1} parent=1 // pred_region
      %s26 = ssub.s32 2048, 2048
      %27 = vsyncadd [#allocation6], %s26
      %s28 = sshll.u32 [#allocation5], 4
      %s29 = int_to_ptr.vmem [resolvable:$true] %s28
      %34 = dma.hbm_to_vmem [thread:$0]  %s1, 2048, %s29, [#allocation6], 128, 128, 8
    $region9: #{tpu_custom_call.1} parent=1 // pred_fallthru
      _
    // Predicated region
    $region10: #{tpu_custom_call.1} parent=1 // pred_check
      _
    $region11: #{tpu_custom_call.1} parent=1 // pred_check_branch
      %36 = sbr.rel (0) target = $region13
    $region12: #{tpu_custom_call.1} parent=1 // pred_region
      _
    $region13: #{tpu_custom_call.1} parent=1 // pred_fallthru
      _
    // Predicated region
    $region14: #{tpu_custom_call.1} parent=1 // pred_check
      _
    $region15: #{tpu_custom_call.1} parent=1 // pred_check_branch
      %38 = sbr.rel (0) target = $region17
    $region16: #{tpu_custom_call.1} parent=1 // pred_region
      %39 = dma.done [#allocation3], 2048
    $region17: #{tpu_custom_call.1} parent=1 // pred_fallthru
      _
    // Predicated region
    $region18: #{tpu_custom_call.1} parent=1 // pred_check
      _
    $region19: #{tpu_custom_call.1} parent=1 // pred_check_branch
      %41 = sbr.rel (0) target = $region21
    $region20: #{tpu_custom_call.1} parent=1 // pred_region
      %42 = dma.done [#allocation6], 2048
    $region21: #{tpu_custom_call.1} parent=1 // pred_fallthru
      _
    %v43 = vld [vmem:[#allocation2] sm:$0xff]
    %v44 = vld [vmem:[#allocation2 + $0x8] sm:$0xff]
    %v45 = vld [vmem:[#allocation2 + $0x10] sm:$0xff]
    %v46 = vld [vmem:[#allocation2 + $0x18] sm:$0xff]
    %v47 = vld [vmem:[#allocation2 + $0x20] sm:$0xff]
    %v48 = vld [vmem:[#allocation2 + $0x28] sm:$0xff]
    %v49 = vld [vmem:[#allocation2 + $0x30] sm:$0xff]
    %v50 = vld [vmem:[#allocation2 + $0x38] sm:$0xff]
    %v51 = vld [vmem:[#allocation2 + $0x40] sm:$0xff]
    %v52 = vld [vmem:[#allocation2 + $0x48] sm:$0xff]
    %v53 = vld [vmem:[#allocation2 + $0x50] sm:$0xff]
    %v54 = vld [vmem:[#allocation2 + $0x58] sm:$0xff]
    %v55 = vld [vmem:[#allocation2 + $0x60] sm:$0xff]
    %v56 = vld [vmem:[#allocation2 + $0x68] sm:$0xff]
    %v57 = vld [vmem:[#allocation2 + $0x70] sm:$0xff]
    %v58 = vld [vmem:[#allocation2 + $0x78] sm:$0xff]
    %v59 = vld [vmem:[#allocation5] sm:$0xff]
    %v60 = vld [vmem:[#allocation5 + $0x8] sm:$0xff]
    %v61 = vld [vmem:[#allocation5 + $0x10] sm:$0xff]
    %v62 = vld [vmem:[#allocation5 + $0x18] sm:$0xff]
    %v63 = vld [vmem:[#allocation5 + $0x20] sm:$0xff]
    %v64 = vld [vmem:[#allocation5 + $0x28] sm:$0xff]
    %v65 = vld [vmem:[#allocation5 + $0x30] sm:$0xff]
    %v66 = vld [vmem:[#allocation5 + $0x38] sm:$0xff]
    %v67 = vld [vmem:[#allocation5 + $0x40] sm:$0xff]
    %v68 = vld [vmem:[#allocation5 + $0x48] sm:$0xff]
    %v69 = vld [vmem:[#allocation5 + $0x50] sm:$0xff]
    %v70 = vld [vmem:[#allocation5 + $0x58] sm:$0xff]
    %v71 = vld [vmem:[#allocation5 + $0x60] sm:$0xff]
    %v72 = vld [vmem:[#allocation5 + $0x68] sm:$0xff]
    %v73 = vld [vmem:[#allocation5 + $0x70] sm:$0xff]
    %v74 = vld [vmem:[#allocation5 + $0x78] sm:$0xff]
    %v75 = vld [vmem:[%s2] sm:$0x1]
    %v77 = vlaneseq
    %v78 = vshrl.u32 %v77, 7
    %v79 = vsub.s32 0, %v78
    %v80 = vrot.slane %v75, %v79
    %82 = vmatprep.subr.mxu0 0.0
    %83 = vmatpush1.msra.mxu0 %v59
    %84 = vmatprep.subr.mxu0 0.0
    %85 = vmatpush1.msra.mxu0 %v60
    %86 = vmatprep.subr.mxu0 0.0
    %87 = vmatpush1.msra.mxu0 %v61
    %88 = vmatprep.subr.mxu0 0.0
    %89 = vmatpush1.msra.mxu0 %v62
    %90 = vmatprep.subr.mxu0 0.0
    %91 = vmatpush1.msra.mxu0 %v63
    %92 = vmatprep.subr.mxu0 0.0
    %93 = vmatpush1.msra.mxu0 %v64
    %94 = vmatprep.subr.mxu0 0.0
    %95 = vmatpush1.msra.mxu0 %v65
    %96 = vmatprep.subr.mxu0 0.0
    %97 = vmatpush1.msra.mxu0 %v66
    %98 = vmatprep.subr.mxu0 0.0
    %99 = vmatpush1.msra.mxu0 %v67
    %100 = vmatprep.subr.mxu0 0.0
    %101 = vmatpush1.msra.mxu0 %v68
    %102 = vmatprep.subr.mxu0 0.0
    %103 = vmatpush1.msra.mxu0 %v69
    %104 = vmatprep.subr.mxu0 0.0
    %105 = vmatpush1.msra.mxu0 %v70
    %106 = vmatprep.subr.mxu0 0.0
    %107 = vmatpush1.msra.mxu0 %v71
    %108 = vmatprep.subr.mxu0 0.0
    %109 = vmatpush1.msra.mxu0 %v72
    %110 = vmatprep.subr.mxu0 0.0
    %111 = vmatpush1.msra.mxu0 %v73
    %112 = vmatprep.subr.mxu0 0.0
    %113 = vmatpush1.msra.mxu0 %v74
    %114 = vmatprep.subr.mxu0 0.0
    %115 = vmatpush1.msra.mxu0 0.0
    %116 = vmatprep.subr.mxu0 0.0
    %117 = vmatpush1.msra.mxu0 0.0
    %118 = vmatprep.subr.mxu0 0.0
    %119 = vmatpush1.msra.mxu0 0.0
    %120 = vmatprep.subr.mxu0 0.0
    %121 = vmatpush1.msra.mxu0 0.0
    %122 = vmatprep.subr.mxu0 0.0
    %123 = vmatpush1.msra.mxu0 0.0
    %124 = vmatprep.subr.mxu0 0.0
    %125 = vmatpush1.msra.mxu0 0.0
    %126 = vmatprep.subr.mxu0 0.0
    %127 = vmatpush1.msra.mxu0 0.0
    %128 = vmatprep.subr.mxu0 0.0
    %129 = vmatpush1.msra.mxu0 0.0
    %130 = vmatprep.subr.mxu0 0.0
    %131 = vmatpush1.msra.mxu0 0.0
    %132 = vmatprep.subr.mxu0 0.0
    %133 = vmatpush1.msra.mxu0 0.0
    %134 = vmatprep.subr.mxu0 0.0
    %135 = vmatpush1.msra.mxu0 0.0
    %136 = vmatprep.subr.mxu0 0.0
    %137 = vmatpush1.msra.mxu0 0.0
    %138 = vmatprep.subr.mxu0 0.0
    %139 = vmatpush1.msra.mxu0 0.0
    %140 = vmatprep.subr.mxu0 0.0
    %141 = vmatpush1.msra.mxu0 0.0
    %142 = vmatprep.subr.mxu0 0.0
    %143 = vmatpush1.msra.mxu0 0.0
    %144 = vmatprep.subr.mxu0 0.0
    %145 = vmatpush1.msra.mxu0 0.0
    %146 = vmatprep.mubr.f32.mxu0 0.0
    %147 = vmatmul.mubr.f32.gmra.mrb[0].mxu0 %v43
    %v148 = vpop.f32.mrb[0].mxu0
    %v149 = vadd.f32 %v80, %v148
    %v150 = vpop.f32.mrb[0].mxu0
    %151 = vmatprep.mubr.f32.mxu0 0.0
    %152 = vmatmul.mubr.f32.gmra.mrb[0].mxu0 %v44
    %v153 = vpop.f32.mrb[0].mxu0
    %v154 = vadd.f32 %v80, %v153
    %v155 = vpop.f32.mrb[0].mxu0
    %156 = vmatprep.mubr.f32.mxu0 0.0
    %157 = vmatmul.mubr.f32.gmra.mrb[0].mxu0 %v45
    %v158 = vpop.f32.mrb[0].mxu0
    %v159 = vadd.f32 %v80, %v158
    %v160 = vpop.f32.mrb[0].mxu0
    %161 = vmatprep.mubr.f32.mxu0 0.0
    %162 = vmatmul.mubr.f32.gmra.mrb[0].mxu0 %v46
    %v163 = vpop.f32.mrb[0].mxu0
    %v164 = vadd.f32 %v80, %v163
    %v165 = vpop.f32.mrb[0].mxu0
    %166 = vmatprep.mubr.f32.mxu0 0.0
    %167 = vmatmul.mubr.f32.gmra.mrb[0].mxu0 %v47
    %v168 = vpop.f32.mrb[0].mxu0
    %v169 = vadd.f32 %v80, %v168
    %v170 = vpop.f32.mrb[0].mxu0
    %171 = vmatprep.mubr.f32.mxu0 0.0
    %172 = vmatmul.mubr.f32.gmra.mrb[0].mxu0 %v48
    %v173 = vpop.f32.mrb[0].mxu0
    %v174 = vadd.f32 %v80, %v173
    %v175 = vpop.f32.mrb[0].mxu0
    %176 = vmatprep.mubr.f32.mxu0 0.0
    %177 = vmatmul.mubr.f32.gmra.mrb[0].mxu0 %v49
    %v178 = vpop.f32.mrb[0].mxu0
    %v179 = vadd.f32 %v80, %v178
    %v180 = vpop.f32.mrb[0].mxu0
    %181 = vmatprep.mubr.f32.mxu0 0.0
    %182 = vmatmul.mubr.f32.gmra.mrb[0].mxu0 %v50
    %v183 = vpop.f32.mrb[0].mxu0
    %v184 = vadd.f32 %v80, %v183
    %v185 = vpop.f32.mrb[0].mxu0
    %186 = vmatprep.mubr.f32.mxu0 0.0
    %187 = vmatmul.mubr.f32.gmra.mrb[0].mxu0 %v51
    %v188 = vpop.f32.mrb[0].mxu0
    %v189 = vadd.f32 %v80, %v188
    %v190 = vpop.f32.mrb[0].mxu0
    %191 = vmatprep.mubr.f32.mxu0 0.0
    %192 = vmatmul.mubr.f32.gmra.mrb[0].mxu0 %v52
    %v193 = vpop.f32.mrb[0].mxu0
    %v194 = vadd.f32 %v80, %v193
    %v195 = vpop.f32.mrb[0].mxu0
    %196 = vmatprep.mubr.f32.mxu0 0.0
    %197 = vmatmul.mubr.f32.gmra.mrb[0].mxu0 %v53
    %v198 = vpop.f32.mrb[0].mxu0
    %v199 = vadd.f32 %v80, %v198
    %v200 = vpop.f32.mrb[0].mxu0
    %201 = vmatprep.mubr.f32.mxu0 0.0
    %202 = vmatmul.mubr.f32.gmra.mrb[0].mxu0 %v54
    %v203 = vpop.f32.mrb[0].mxu0
    %v204 = vadd.f32 %v80, %v203
    %v205 = vpop.f32.mrb[0].mxu0
    %206 = vmatprep.mubr.f32.mxu0 0.0
    %207 = vmatmul.mubr.f32.gmra.mrb[0].mxu0 %v55
    %v208 = vpop.f32.mrb[0].mxu0
    %v209 = vadd.f32 %v80, %v208
    %v210 = vpop.f32.mrb[0].mxu0
    %211 = vmatprep.mubr.f32.mxu0 0.0
    %212 = vmatmul.mubr.f32.gmra.mrb[0].mxu0 %v56
    %v213 = vpop.f32.mrb[0].mxu0
    %v214 = vadd.f32 %v80, %v213
    %v215 = vpop.f32.mrb[0].mxu0
    %216 = vmatprep.mubr.f32.mxu0 0.0
    %217 = vmatmul.mubr.f32.gmra.mrb[0].mxu0 %v57
    %v218 = vpop.f32.mrb[0].mxu0
    %v219 = vadd.f32 %v80, %v218
    %v220 = vpop.f32.mrb[0].mxu0
    %221 = vmatprep.mubr.f32.mxu0 0.0
    %222 = vmatmul.mubr.f32.gmra.mrb[0].mxu0 %v58
    %v223 = vpop.f32.mrb[0].mxu0
    %v224 = vadd.f32 %v80, %v223
    %v225 = vpop.f32.mrb[0].mxu0
    %226 = vdwg.mxu0
    %227 = vst [vmem:[#allocation7] sm:$0xff] %v149
    %228 = vst [vmem:[#allocation7 + $0x8] sm:$0xff] %v154
    %229 = vst [vmem:[#allocation7 + $0x10] sm:$0xff] %v159
    %230 = vst [vmem:[#allocation7 + $0x18] sm:$0xff] %v164
    %231 = vst [vmem:[#allocation7 + $0x20] sm:$0xff] %v169
    %232 = vst [vmem:[#allocation7 + $0x28] sm:$0xff] %v174
    %233 = vst [vmem:[#allocation7 + $0x30] sm:$0xff] %v179
    %234 = vst [vmem:[#allocation7 + $0x38] sm:$0xff] %v184
    %235 = vst [vmem:[#allocation7 + $0x40] sm:$0xff] %v189
    %236 = vst [vmem:[#allocation7 + $0x48] sm:$0xff] %v194
    %237 = vst [vmem:[#allocation7 + $0x50] sm:$0xff] %v199
    %238 = vst [vmem:[#allocation7 + $0x58] sm:$0xff] %v204
    %239 = vst [vmem:[#allocation7 + $0x60] sm:$0xff] %v209
    %240 = vst [vmem:[#allocation7 + $0x68] sm:$0xff] %v214
    %241 = vst [vmem:[#allocation7 + $0x70] sm:$0xff] %v219
    %242 = vst [vmem:[#allocation7 + $0x78] sm:$0xff] %v224
    // Predicated region
    $region22: #{tpu_custom_call.1} parent=1 // pred_check
      _
    $region23: #{tpu_custom_call.1} parent=1 // pred_check_branch
      %244 = sbr.rel (0) target = $region25
    $region24: #{tpu_custom_call.1} parent=1 // pred_region
      %s246 = ssub.s32 2048, 2048
      %247 = vsyncadd [#allocation4], %s246
      %s248 = sshll.u32 [#allocation7], 4
      %s249 = int_to_ptr.vmem [resolvable:$true] %s248
      %254 = dma.vmem_to_hbm [thread:$0]  %s249, 2048, %s3, [#allocation4], 128, 128, 8
    $region25: #{tpu_custom_call.1} parent=1 // pred_fallthru
      _
    // Predicated region
    $region26: #{tpu_custom_call.1} parent=1 // pred_check
      _
    $region27: #{tpu_custom_call.1} parent=1 // pred_check_branch
      %256 = sbr.rel (0) target = $region29
    $region28: #{tpu_custom_call.1} parent=1 // pred_region
      %257 = dma.done [#allocation4], 2048
    $region29: #{tpu_custom_call.1} parent=1 // pred_fallthru
      _
    %258 = vsyncpa [#allocation3], 1
    %259 = vsyncpa [#allocation6], 1
    %260 = vsyncpa [#allocation4], 1

</llo_original>
